<compile_context>
chip_gen: v7x
topology: tpu7x:2x2x1
jax: 0.10.0
libtpu: 0.0.40
codegen_flags: <defaults>
</compile_context>

<pallas_src>
import functools

import jax
import jax.numpy as jnp
from jax.experimental import pallas as pl
from jax.experimental.pallas import tpu as pltpu

_LANE = 128
_MAX_TM = 4096            # max batch-tile rows (amortizes per-step overhead)
_DEFAULT_BLOCK_H = 1024   # max hidden tile when weights do not fit resident


def _round_up(x, m):
    return (x + m - 1) // m * m


def _vmem_info():
    """(budget_bytes, vmem_limit_bytes) — generation aware, conservative fallback."""
    try:
        cap = int(pltpu.get_tpu_info().vmem_capacity_bytes)
    except Exception:
        cap = 64 << 20  # assume the smallest (v7x per-TC) VMEM
    return int(cap * 0.65), int(cap * 0.80)


# --------------------------------------------------------------------------
# Kernels
# --------------------------------------------------------------------------
def _mlp_kernel_single(x_ref, w1_ref, b1_ref, w2_ref, b2_ref, o_ref, *,
                       skip_connection):
    """n_k == 1: whole hidden dim resident, write output directly (no acc RMW)."""
    x = x_ref[...]                                                    # (tm, din)
    h = jnp.dot(x, w1_ref[...], preferred_element_type=jnp.float32)  # (tm, H)
    h = jnp.maximum(h + b1_ref[...], 0.0)
    y = jnp.dot(h.astype(w2_ref.dtype), w2_ref[...],
                preferred_element_type=jnp.float32)                  # (tm, Dout_p)
    y = y + b2_ref[...]
    if skip_connection:  # only taken when x width == padded output width
        y = y + x.astype(jnp.float32)
    o_ref[...] = y.astype(o_ref.dtype)


def _mlp_kernel_multi(x_ref, w1_ref, b1_ref, w2_ref, b2_ref, o_ref, acc_ref, *,
                      skip_connection):
    """n_k > 1: reduce over hidden tiles into an f32 VMEM accumulator."""
    k = pl.program_id(1)

    @pl.when(k == 0)
    def _():
        acc_ref[...] = jnp.zeros_like(acc_ref)

    x = x_ref[...]                                                    # (tm, din)
    h = jnp.dot(x, w1_ref[...], preferred_element_type=jnp.float32)  # (tm, tk_h)
    h = jnp.maximum(h + b1_ref[...], 0.0)
    acc_ref[...] += jnp.dot(h.astype(w2_ref.dtype), w2_ref[...],
                            preferred_element_type=jnp.float32)       # (tm, Dout_p)

    @pl.when(k == pl.num_programs(1) - 1)
    def _():
        y = acc_ref[...] + b2_ref[...]
        if skip_connection:  # only taken when x width == padded output width
            y = y + x.astype(jnp.float32)
        o_ref[...] = y.astype(o_ref.dtype)


# --------------------------------------------------------------------------
# Parameter preparation (one-time, outside the hot path)
# --------------------------------------------------------------------------
def init_linear_params(key, in_features, out_features, dtype=jnp.float32):
    """Matches torch nn.Linear.reset_parameters: U(-1/sqrt(in), 1/sqrt(in))."""
    kw, kb = jax.random.split(key)
    bound = 1.0 / (in_features ** 0.5)
    w = jax.random.uniform(kw, (out_features, in_features), dtype, -bound, bound)
    b = jax.random.uniform(kb, (out_features,), dtype, -bound, bound)
    return w, b


def prepare_params(w1, b1, w2, b2, *, compute_dtype=None, block_h=None):
    """Convert torch nn.Linear layout to the kernel-friendly layout (once).

    w1: (hidden, in), b1: (hidden,), w2: (out, hidden), b2: (out,).
    Weights are transposed; hidden/output dims lane-padded to 128; input dim
    kept unpadded.  Biases stay f32.  compute_dtype (e.g. bf16) applies to the
    MXU operands only.
    """
    w1, b1, w2, b2 = map(jnp.asarray, (w1, b1, w2, b2))
    hidden_dim, input_dim = w1.shape
    output_dim, hidden_dim2 = w2.shape
    assert hidden_dim == hidden_dim2, "w1/w2 hidden dims disagree"
    assert b1.shape == (hidden_dim,) and b2.shape == (output_dim,)

    wdt = jnp.dtype(w1.dtype if compute_dtype is None else compute_dtype)
    isz = wdt.itemsize

    dout_p = _round_up(output_dim, _LANE)
    h_p = _round_up(hidden_dim, _LANE)

    budget, _ = _vmem_info()
    if block_h is None:
        # Keep the whole hidden dim resident when both (padded, double-buffered)
        # weights fit in ~half the VMEM budget -> weights DMA'd exactly once.
        w_bytes = 2 * (input_dim * h_p + h_p * dout_p) * isz
        tk_h = h_p if w_bytes <= budget // 2 else min(h_p, _DEFAULT_BLOCK_H)
    else:
        tk_h = min(_round_up(max(int(block_h), 1), _LANE), h_p)
    h_p = _round_up(h_p, tk_h)  # make tk_h an exact divisor of the padded hidden dim

    w1_t = jnp.zeros((input_dim, h_p), wdt).at[:, :hidden_dim].set(w1.T.astype(wdt))
    w2_t = jnp.zeros((h_p, dout_p), wdt).at[:hidden_dim, :output_dim].set(
        w2.T.astype(wdt))
    b1_p = jnp.zeros((1, h_p), jnp.float32).at[0, :hidden_dim].set(
        b1.astype(jnp.float32))
    b2_p = jnp.zeros((1, dout_p), jnp.float32).at[0, :output_dim].set(
        b2.astype(jnp.float32))

    return dict(w1=w1_t, b1=b1_p, w2=w2_t, b2=b2_p,
                input_dim=input_dim, hidden_dim=hidden_dim, output_dim=output_dim,
                block_h=tk_h)


# --------------------------------------------------------------------------
# Forward
# --------------------------------------------------------------------------
def tiny_mlp_forward(x, params, *, skip_connection=False, block_m=None,
                     out_dtype=None):
    """x: (B, input_dim). params: output of prepare_params()."""
    B, input_dim = x.shape
    assert input_dim == params["input_dim"], "input_dim mismatch"
    output_dim = params["output_dim"]
    if skip_connection:
        assert input_dim == output_dim, "skip connection requires input_dim == output_dim"

    w1, b1, w2, b2 = params["w1"], params["b1"], params["w2"], params["b2"]
    din, h_p = w1.shape
    dout_p = w2.shape[1]
    tk_h = params["block_h"]
    n_k = h_p // tk_h

    cdt = jnp.dtype(w1.dtype)
    out_dtype = jnp.dtype(x.dtype if out_dtype is None else out_dtype)
    isz = cdt.itemsize
    min_mult = max(8, 32 // isz)          # sublane multiple: 8 (f32) / 16 (bf16)
    budget, vmem_limit = _vmem_info()

    def vmem_est(tm_):
        w_bytes = 2 * (din * tk_h + tk_h * dout_p) * isz + 2 * (tk_h + dout_p) * 4
        act = 2 * tm_ * din * isz + 2 * tm_ * dout_p * out_dtype.itemsize
        hidden = tm_ * tk_h * 4 + (tm_ * tk_h * isz if isz != 4 else 0)
        acc = tm_ * dout_p * 4 if n_k > 1 else 0
        return w_bytes + act + hidden + acc

    # ---- batch tile selection -------------------------------------------
    if block_m is None:
        cap = _round_up(B, min_mult)
        if B >= 2 * min_mult:
            # ensure >= 2 batch tiles so the "parallel" axis splits across
            # both v7x TensorCores (no-op on single-TC v5e/v6e).
            cap = min(cap, _round_up(pl.cdiv(B, 2), min_mult))
        cap = min(cap, _MAX_TM)
        tm = min(min_mult, cap)
        while tm * 2 <= cap and vmem_est(tm * 2) <= budget:
            tm *= 2
    else:
        tm = max(1, min(int(block_m), B))
        tm = _round_up(tm, min_mult) if B > min_mult else B
        while vmem_est(tm) > budget and tm > min_mult:
            tm = max(min_mult, _round_up(tm // 2, min_mult))

    b_pad = _round_up(B, tm)
    n_batch = b_pad // tm

    # ---- activation prep: only cast / pad when actually needed ----------
    x_in = x if x.dtype == cdt else x.astype(cdt)
    if b_pad != B:
        x_in = jnp.pad(x_in, ((0, b_pad - B), (0, 0)))

    # Skip is fused in-kernel only when widths already match; otherwise it is
    # added in the wrapper on the original-dtype x (exact residual).
    skip_in_kernel = skip_connection and (din == dout_p)

    # ---- cost estimate (weights streamed per batch tile only if n_k > 1) --
    w_stream = 1 if n_k == 1 else n_batch
    flops = 2 * b_pad * (din * h_p + h_p * dout_p)
    bytes_accessed = (b_pad * din * isz
                      + w_stream * (w1.size + w2.size) * isz
                      + (b1.size + b2.size) * 4
                      + b_pad * dout_p * out_dtype.itemsize)
    cost = pl.CostEstimate(flops=int(flops), transcendentals=0,
                           bytes_accessed=int(bytes_accessed))

    # ---- grid / specs -----------------------------------------------------
    if n_k == 1:
        kernel = functools.partial(_mlp_kernel_single,
                                   skip_connection=skip_in_kernel)
        grid = (n_batch,)
        in_specs = [
            pl.BlockSpec((tm, din), lambda i: (i, 0)),       # x tile (din unpadded)
            pl.BlockSpec((din, h_p), lambda i: (0, 0)),      # W1 (resident)
            pl.BlockSpec((1, h_p), lambda i: (0, 0)),        # b1
            pl.BlockSpec((h_p, dout_p), lambda i: (0, 0)),   # W2 (resident)
            pl.BlockSpec((1, dout_p), lambda i: (0, 0)),     # b2
        ]
        out_specs = pl.BlockSpec((tm, dout_p), lambda i: (i, 0))
        scratch = ()
        dims = ("parallel",)
    else:
        kernel = functools.partial(_mlp_kernel_multi,
                                   skip_connection=skip_in_kernel)
        grid = (n_batch, n_k)

        def kser(i, k):
            # serpentine hidden index: k on even batch tiles, n_k-1-k on odd ones
            return k + (i % 2) * ((n_k - 1) - 2 * k)

        in_specs = [
            pl.BlockSpec((tm, din), lambda i, k: (i, 0)),
            pl.BlockSpec((din, tk_h), lambda i, k: (0, kser(i, k))),
            pl.BlockSpec((1, tk_h), lambda i, k: (0, kser(i, k))),
            pl.BlockSpec((tk_h, dout_p), lambda i, k: (kser(i, k), 0)),
            pl.BlockSpec((1, dout_p), lambda i, k: (0, 0)),
        ]
        out_specs = pl.BlockSpec((tm, dout_p), lambda i, k: (i, 0))
        scratch = (pltpu.VMEM((tm, dout_p), jnp.float32),)
        dims = ("parallel", "arbitrary")

    est = vmem_est(tm)
    limit = vmem_limit if est > (16 << 20) else None

    out_padded = pl.pallas_call(
        kernel,
        out_shape=jax.ShapeDtypeStruct((b_pad, dout_p), out_dtype),
        grid_spec=pltpu.PrefetchScalarGridSpec(
            num_scalar_prefetch=0,
            grid=grid,
            in_specs=in_specs,
            out_specs=out_specs,
            scratch_shapes=scratch),
        compiler_params=pltpu.CompilerParams(
            dimension_semantics=dims,
            vmem_limit_bytes=limit),
        cost_estimate=cost,
    )(x_in, w1, b1, w2, b2)

    out = out_padded
    if b_pad != B or dout_p != output_dim:
        out = out[:B, :output_dim]
    if skip_connection and not skip_in_kernel:
        # Residual added on the original (typically f32) x: exact even when the
        # kernel's MXU operands are bf16.
        out = out + x.astype(out.dtype)
    return out


# --------------------------------------------------------------------------
# Self-test
# --------------------------------------------------------------------------
if __name__ == "__main__":
    # Small shapes consistent with the module: input_dim=16, hidden=32, output=16.
    batch, input_dim, hidden_dim, output_dim = 8, 16, 32, 16

    key = jax.random.PRNGKey(0)
    kx, kx2, k1, k2, k3, k4 = jax.random.split(key, 6)

    x = jax.random.normal(kx, (batch, input_dim), jnp.float32)
    w1, b1 = init_linear_params(k1, input_dim, hidden_dim)
    w2, b2 = init_linear_params(k2, hidden_dim, output_dim)

    def ref_fwd(xv, w1_, b1_, w2_, b2_, skip):
        hp = jax.lax.Precision.HIGHEST
        h = jnp.maximum(jnp.dot(xv, w1_.T, precision=hp) + b1_, 0.0)
        y = jnp.dot(h, w2_.T, precision=hp) + b2_
        return y + xv if skip else y

    # --- f32, single hidden tile (n_k == 1 fast path) ---
    params = prepare_params(w1, b1, w2, b2)
    out = jax.block_until_ready(tiny_mlp_forward(x, params, skip_connection=False))
    assert out.shape == (batch, output_dim)
    assert jnp.allclose(out, ref_fwd(x, w1, b1, w2, b2, False),
                        atol=1e-4, rtol=1e-4), "f32 mismatch"

    # --- skip connection + multiple batch tiles (batch 20 padded to 24) ---
    x2 = jax.random.normal(kx2, (20, input_dim), jnp.float32)
    out2 = jax.block_until_ready(
        tiny_mlp_forward(x2, params, skip_connection=True, block_m=8))
    assert out2.shape == (20, output_dim)
    assert jnp.allclose(out2, ref_fwd(x2, w1, b1, w2, b2, True),
                        atol=1e-4, rtol=1e-4), "skip mismatch"

    # --- bf16 MXU operands, f32 bias/ReLU/accumulation (loose check) ---
    params_bf16 = prepare_params(w1, b1, w2, b2, compute_dtype=jnp.bfloat16)
    out3 = jax.block_until_ready(tiny_mlp_forward(x, params_bf16))
    assert out3.shape == (batch, output_dim)
    assert jnp.allclose(out3, ref_fwd(x, w1, b1, w2, b2, False),
                        atol=2e-1, rtol=2e-1), "bf16 mismatch"

    # --- n_k > 1 reduction path (hidden=256 split into 128-wide tiles) + skip ---
    hidden_big = 256
    w1b, b1b = init_linear_params(k3, input_dim, hidden_big)
    w2b, b2b = init_linear_params(k4, hidden_big, output_dim)
    params_big = prepare_params(w1b, b1b, w2b, b2b, block_h=128)
    x3 = jax.random.normal(kx, (32, input_dim), jnp.float32)
    out4 = jax.block_until_ready(
        tiny_mlp_forward(x3, params_big, skip_connection=True))
    assert out4.shape == (32, output_dim)
    assert jnp.allclose(out4, ref_fwd(x3, w1b, b1b, w2b, b2b, True),
                        atol=1e-4, rtol=1e-4), "multi-k mismatch"

    print("KERNEL_OK")
</pallas_src>

<mosaic_0001>
module attributes {stable_mosaic.version = 11 : i64} {
  func.func @_mlp_kernel_single(%arg0: i32, %arg1: memref<8x16xf32, #tpu.memory_space<vmem>>, %arg2: memref<16x128xf32, #tpu.memory_space<vmem>>, %arg3: memref<1x128xf32, #tpu.memory_space<vmem>>, %arg4: memref<128x128xf32, #tpu.memory_space<vmem>>, %arg5: memref<1x128xf32, #tpu.memory_space<vmem>>, %arg6: memref<8x128xf32, #tpu.memory_space<vmem>>) attributes {dimension_semantics = [#tpu.dimension_semantics<parallel>], iteration_bounds = array<i64: 1>, scalar_prefetch = 0 : i64, scratch_operands = 0 : i64, tpu.core_type = #tpu.core_type<tc>, window_params = [{transform_indices = @transform_0, window_bounds = array<i64: 8, 16>}, {pipeline_mode = #tpu.pipeline_mode<synchronous>, transform_indices = @transform_1, window_bounds = array<i64: 16, 128>}, {pipeline_mode = #tpu.pipeline_mode<synchronous>, transform_indices = @transform_2, window_bounds = array<i64: 1, 128>}, {pipeline_mode = #tpu.pipeline_mode<synchronous>, transform_indices = @transform_3, window_bounds = array<i64: 128, 128>}, {pipeline_mode = #tpu.pipeline_mode<synchronous>, transform_indices = @transform_4, window_bounds = array<i64: 1, 128>}, {transform_indices = @transform_5, window_bounds = array<i64: 8, 128>}]} {
    %c0 = arith.constant 0 : index
    %c0_0 = arith.constant 0 : index
    %0 = vector.load %arg1[%c0, %c0_0] : memref<8x16xf32, #tpu.memory_space<vmem>>, vector<8x16xf32>
    %c0_1 = arith.constant 0 : index
    %c0_2 = arith.constant 0 : index
    %1 = vector.load %arg2[%c0_1, %c0_2] : memref<16x128xf32, #tpu.memory_space<vmem>>, vector<16x128xf32>
    %cst = arith.constant dense<0.000000e+00> : vector<8x128xf32>
    %2 = tpu.matmul %0, %1, %cst {dimension_numbers = #tpu.dot_dimension_numbers<[1], [0], [0], [1], [0, 0, 1, 1], [], []>} : vector<8x16xf32>, vector<16x128xf32>, vector<8x128xf32> -> vector<8x128xf32>
    %c0_3 = arith.constant 0 : index
    %c0_4 = arith.constant 0 : index
    %3 = vector.load %arg3[%c0_3, %c0_4] : memref<1x128xf32, #tpu.memory_space<vmem>>, vector<1x128xf32>
    %4 = vector.broadcast %3 : vector<1x128xf32> to vector<8x128xf32>
    %5 = arith.addf %2, %4 : vector<8x128xf32>
    %cst_5 = arith.constant 0.000000e+00 : f32
    %6 = vector.broadcast %cst_5 : f32 to vector<8x128xf32>
    %7 = arith.maximumf %5, %6 : vector<8x128xf32>
    %c0_6 = arith.constant 0 : index
    %c0_7 = arith.constant 0 : index
    %8 = vector.load %arg4[%c0_6, %c0_7] : memref<128x128xf32, #tpu.memory_space<vmem>>, vector<128x128xf32>
    %cst_8 = arith.constant dense<0.000000e+00> : vector<8x128xf32>
    %9 = tpu.matmul %7, %8, %cst_8 {dimension_numbers = #tpu.dot_dimension_numbers<[1], [0], [0], [1], [0, 0, 1, 1], [], []>} : vector<8x128xf32>, vector<128x128xf32>, vector<8x128xf32> -> vector<8x128xf32>
    %c0_9 = arith.constant 0 : index
    %c0_10 = arith.constant 0 : index
    %10 = vector.load %arg5[%c0_9, %c0_10] : memref<1x128xf32, #tpu.memory_space<vmem>>, vector<1x128xf32>
    %11 = vector.broadcast %10 : vector<1x128xf32> to vector<8x128xf32>
    %12 = arith.addf %9, %11 : vector<8x128xf32>
    %c0_11 = arith.constant 0 : index
    %c0_12 = arith.constant 0 : index
    %13 = vector.load %arg6[%c0_11, %c0_12] : memref<8x128xf32, #tpu.memory_space<vmem>>, vector<8x128xf32>
    tpu.vector_store %arg6[%c0_11, %c0_12], %12 {strides = array<i32>} : memref<8x128xf32, #tpu.memory_space<vmem>>, vector<8x128xf32>,
    return
  }
  func.func @transform_0(%arg0: i32) -> (i32, i32) {
    %c0_i32 = arith.constant 0 : i32
    %c0_i32_0 = arith.constant 0 : i32
    return %arg0, %c0_i32 : i32, i32
  }
  func.func @transform_1(%arg0: i32) -> (i32, i32) {
    %c0_i32 = arith.constant 0 : i32
    %c0_i32_0 = arith.constant 0 : i32
    %c0_i32_1 = arith.constant 0 : i32
    return %c0_i32, %c0_i32_0 : i32, i32
  }
  func.func @transform_2(%arg0: i32) -> (i32, i32) {
    %c0_i32 = arith.constant 0 : i32
    %c0_i32_0 = arith.constant 0 : i32
    %c0_i32_1 = arith.constant 0 : i32
    return %c0_i32, %c0_i32_0 : i32, i32
  }
  func.func @transform_3(%arg0: i32) -> (i32, i32) {
    %c0_i32 = arith.constant 0 : i32
    %c0_i32_0 = arith.constant 0 : i32
    %c0_i32_1 = arith.constant 0 : i32
    return %c0_i32, %c0_i32_0 : i32, i32
  }
  func.func @transform_4(%arg0: i32) -> (i32, i32) {
    %c0_i32 = arith.constant 0 : i32
    %c0_i32_0 = arith.constant 0 : i32
    %c0_i32_1 = arith.constant 0 : i32
    return %c0_i32, %c0_i32_0 : i32, i32
  }
  func.func @transform_5(%arg0: i32) -> (i32, i32) {
    %c0_i32 = arith.constant 0 : i32
    %c0_i32_0 = arith.constant 0 : i32
    return %arg0, %c0_i32 : i32, i32
  }
}

</mosaic_0001>

<llo_original>
// kernel: tpu_custom_call.1
$region0: #{tpu_custom_call.1}
  #allocation0 [shape = 'u32[]', space=smem, size = 0x4, offset = 0x4, fixed_abs, tag = 'smem constant byte address 0x4 - core index']
  #allocation1 [shape = 'u32[144,128]{1,0:T(1,128)}', space=vmem, size = 0x12000, scoped, tag = 'internal scratch']
  %s0 = inlined_call_operand.hbm [shape: f32[8,16], index: 0, kind: input, shape index: {}]
  %s1 = inlined_call_operand.hbm [shape: f32[16,128], index: 1, kind: input, shape index: {}]
  %s2 = inlined_call_operand.vmem [shape: f32[1,128], index: 2, kind: input, shape index: {}]
  %s3 = inlined_call_operand.hbm [shape: f32[128,128], index: 3, kind: input, shape index: {}]
  %s4 = inlined_call_operand.vmem [shape: f32[1,128], index: 4, kind: input, shape index: {}]
  %s5 = inlined_call_operand.hbm [shape: f32[8,128], index: 5, kind: output, shape index: {}]
  %s6 = sld [smem:[#allocation0]]
  $region42: #{tpu_custom_call.1} parent=0
    _
  %s8 = ssub.s32 1, %s6
  %s9 = scalar_select 0, %s8, %s6
  $region1: #{tpu_custom_call.1} parent=0
    #allocation2 [shape = 'u8[4096]{0}', space=vmem, size = 0x1000, scoped, tag = 'input window, operand 0, single buffered']
    #allocation3 [shape = 's32[1]{0}', space=sflag, size = 0x4, scoped, tag = 'scoped memory for tpu_custom_call.1']
    #allocation4 [shape = 's32[1]{0}', space=sflag, size = 0x4, scoped, tag = 'scoped memory for tpu_custom_call.1']
    #allocation5 [shape = 'u8[8192]{0}', space=vmem, size = 0x2000, scoped, tag = 'input window, operand 1, single buffered']
    #allocation6 [shape = 's32[1]{0}', space=sflag, size = 0x4, scoped, tag = 'scoped memory for tpu_custom_call.1']
    #allocation7 [shape = 'u8[65536]{0}', space=vmem, size = 0x10000, scoped, tag = 'input window, operand 3, single buffered']
    #allocation8 [shape = 'u8[4096]{0}', space=vmem, size = 0x1000, scoped, tag = 'output window, operand 0, single buffered']
    %10 = vsyncpa [#allocation3], 0
    %11 = vsyncpa [#allocation6], 0
    %12 = vsyncpa [#allocation4], 0
    // Predicated region
    $region2: #{tpu_custom_call.1} parent=1 // pred_check
      _
    $region3: #{tpu_custom_call.1} parent=1 // pred_check_branch
      %14 = sbr.rel (0) target = $region5
    $region4: #{tpu_custom_call.1} parent=1 // pred_region
      %s16 = ssub.s32 128, 128
      %17 = vsyncadd [#allocation3], %s16
      %s19 = sshll.u32 [#allocation2], 4
      %s20 = int_to_ptr.vmem [resolvable:$true] %s19
      %22 = dma.hbm_to_vmem [thread:$0]  %s0, 128, %s20, [#allocation3]
    $region5: #{tpu_custom_call.1} parent=1 // pred_fallthru
      _
    // Predicated region
    $region6: #{tpu_custom_call.1} parent=1 // pred_check
      _
    $region7: #{tpu_custom_call.1} parent=1 // pred_check_branch
      %24 = sbr.rel (0) target = $region9
    $region8: #{tpu_custom_call.1} parent=1 // pred_region
      %s26 = ssub.s32 256, 256
      %27 = vsyncadd [#allocation6], %s26
      %s28 = sshll.u32 [#allocation5], 4
      %s29 = int_to_ptr.vmem [resolvable:$true] %s28
      %34 = dma.hbm_to_vmem [thread:$0]  %s1, 256, %s29, [#allocation6], 128, 128, 8
    $region9: #{tpu_custom_call.1} parent=1 // pred_fallthru
      _
    // Predicated region
    $region10: #{tpu_custom_call.1} parent=1 // pred_check
      _
    $region11: #{tpu_custom_call.1} parent=1 // pred_check_branch
      %36 = sbr.rel (0) target = $region13
    $region12: #{tpu_custom_call.1} parent=1 // pred_region
      _
    $region13: #{tpu_custom_call.1} parent=1 // pred_fallthru
      _
    // Predicated region
    $region14: #{tpu_custom_call.1} parent=1 // pred_check
      _
    $region15: #{tpu_custom_call.1} parent=1 // pred_check_branch
      %38 = sbr.rel (0) target = $region17
    $region16: #{tpu_custom_call.1} parent=1 // pred_region
      %s40 = ssub.s32 2048, 2048
      %41 = vsyncadd [#allocation6], %s40
      %s42 = sshll.u32 [#allocation7], 4
      %s43 = int_to_ptr.vmem [resolvable:$true] %s42
      %48 = dma.hbm_to_vmem [thread:$0]  %s3, 2048, %s43, [#allocation6], 128, 128, 8
    $region17: #{tpu_custom_call.1} parent=1 // pred_fallthru
      _
    // Predicated region
    $region18: #{tpu_custom_call.1} parent=1 // pred_check
      _
    $region19: #{tpu_custom_call.1} parent=1 // pred_check_branch
      %50 = sbr.rel (0) target = $region21
    $region20: #{tpu_custom_call.1} parent=1 // pred_region
      _
    $region21: #{tpu_custom_call.1} parent=1 // pred_fallthru
      _
    // Predicated region
    $region22: #{tpu_custom_call.1} parent=1 // pred_check
      _
    $region23: #{tpu_custom_call.1} parent=1 // pred_check_branch
      %52 = sbr.rel (0) target = $region25
    $region24: #{tpu_custom_call.1} parent=1 // pred_region
      %53 = dma.done [#allocation3], 128
    $region25: #{tpu_custom_call.1} parent=1 // pred_fallthru
      _
    // Predicated region
    $region26: #{tpu_custom_call.1} parent=1 // pred_check
      _
    $region27: #{tpu_custom_call.1} parent=1 // pred_check_branch
      %55 = sbr.rel (0) target = $region29
    $region28: #{tpu_custom_call.1} parent=1 // pred_region
      %56 = dma.done [#allocation6], 256
    $region29: #{tpu_custom_call.1} parent=1 // pred_fallthru
      _
    // Predicated region
    $region30: #{tpu_custom_call.1} parent=1 // pred_check
      _
    $region31: #{tpu_custom_call.1} parent=1 // pred_check_branch
      %58 = sbr.rel (0) target = $region33
    $region32: #{tpu_custom_call.1} parent=1 // pred_region
      %59 = dma.done [#allocation6], 2048
    $region33: #{tpu_custom_call.1} parent=1 // pred_fallthru
      _
    %v60 = vld [vmem:[#allocation2] sm:$0xff]
    %v61 = vld [vmem:[#allocation5] sm:$0xff]
    %v62 = vld [vmem:[#allocation5 + $0x8] sm:$0xff]
    %v63 = vld [vmem:[%s2] sm:$0x1]
    %v65 = vlaneseq
    %v66 = vshrl.u32 %v65, 7
    %v67 = vsub.s32 0, %v66
    %v68 = vrot.slane %v63, %v67
    %vm70 = vcmask 130048
    %v72 = vsel %vm70, %v60, 0
    %74 = vmatprep.subr.mxu0 0.0
    %75 = vmatpush1.msra.mxu0 %v61
    %76 = vmatprep.subr.mxu0 0.0
    %77 = vmatpush1.msra.mxu0 %v62
    %78 = vmatprep.subr.mxu0 0.0
    %79 = vmatpush1.msra.mxu0 0.0
    %80 = vmatprep.subr.mxu0 0.0
    %81 = vmatpush1.msra.mxu0 0.0
    %82 = vmatprep.subr.mxu0 0.0
    %83 = vmatpush1.msra.mxu0 0.0
    %84 = vmatprep.subr.mxu0 0.0
    %85 = vmatpush1.msra.mxu0 0.0
    %86 = vmatprep.subr.mxu0 0.0
    %87 = vmatpush1.msra.mxu0 0.0
    %88 = vmatprep.subr.mxu0 0.0
    %89 = vmatpush1.msra.mxu0 0.0
    %90 = vmatprep.subr.mxu0 0.0
    %91 = vmatpush1.msra.mxu0 0.0
    %92 = vmatprep.subr.mxu0 0.0
    %93 = vmatpush1.msra.mxu0 0.0
    %94 = vmatprep.subr.mxu0 0.0
    %95 = vmatpush1.msra.mxu0 0.0
    %96 = vmatprep.subr.mxu0 0.0
    %97 = vmatpush1.msra.mxu0 0.0
    %98 = vmatprep.subr.mxu0 0.0
    %99 = vmatpush1.msra.mxu0 0.0
    %100 = vmatprep.subr.mxu0 0.0
    %101 = vmatpush1.msra.mxu0 0.0
    %102 = vmatprep.subr.mxu0 0.0
    %103 = vmatpush1.msra.mxu0 0.0
    %104 = vmatprep.subr.mxu0 0.0
    %105 = vmatpush1.msra.mxu0 0.0
    %106 = vmatprep.subr.mxu0 0.0
    %107 = vmatpush1.msra.mxu0 0.0
    %108 = vmatprep.subr.mxu0 0.0
    %109 = vmatpush1.msra.mxu0 0.0
    %110 = vmatprep.subr.mxu0 0.0
    %111 = vmatpush1.msra.mxu0 0.0
    %112 = vmatprep.subr.mxu0 0.0
    %113 = vmatpush1.msra.mxu0 0.0
    %114 = vmatprep.subr.mxu0 0.0
    %115 = vmatpush1.msra.mxu0 0.0
    %116 = vmatprep.subr.mxu0 0.0
    %117 = vmatpush1.msra.mxu0 0.0
    %118 = vmatprep.subr.mxu0 0.0
    %119 = vmatpush1.msra.mxu0 0.0
    %120 = vmatprep.subr.mxu0 0.0
    %121 = vmatpush1.msra.mxu0 0.0
    %122 = vmatprep.subr.mxu0 0.0
    %123 = vmatpush1.msra.mxu0 0.0
    %124 = vmatprep.subr.mxu0 0.0
    %125 = vmatpush1.msra.mxu0 0.0
    %126 = vmatprep.subr.mxu0 0.0
    %127 = vmatpush1.msra.mxu0 0.0
    %128 = vmatprep.subr.mxu0 0.0
    %129 = vmatpush1.msra.mxu0 0.0
    %130 = vmatprep.subr.mxu0 0.0
    %131 = vmatpush1.msra.mxu0 0.0
    %132 = vmatprep.subr.mxu0 0.0
    %133 = vmatpush1.msra.mxu0 0.0
    %134 = vmatprep.subr.mxu0 0.0
    %135 = vmatpush1.msra.mxu0 0.0
    %136 = vmatprep.subr.mxu0 0.0
    %137 = vmatpush1.msra.mxu0 0.0
    %138 = vmatprep.mubr.f32.mxu0 0.0
    %139 = vmatmul.mubr.f32.gmra.mrb[0].mxu0 %v72
    %v140 = vpop.f32.mrb[0].mxu0
    %v141 = vadd.f32 %v68, %v140
    %v142 = vpop.f32.mrb[0].mxu0
    %143 = vdwg.mxu0
    %v144 = vmax.f32 %v141, 0.0
    %v145 = vld [vmem:[#allocation7] sm:$0xff]
    %v146 = vld [vmem:[#allocation7 + $0x8] sm:$0xff]
    %v147 = vld [vmem:[#allocation7 + $0x10] sm:$0xff]
    %v148 = vld [vmem:[#allocation7 + $0x18] sm:$0xff]
    %v149 = vld [vmem:[#allocation7 + $0x20] sm:$0xff]
    %v150 = vld [vmem:[#allocation7 + $0x28] sm:$0xff]
    %v151 = vld [vmem:[#allocation7 + $0x30] sm:$0xff]
    %v152 = vld [vmem:[#allocation7 + $0x38] sm:$0xff]
    %v153 = vld [vmem:[#allocation7 + $0x40] sm:$0xff]
    %v154 = vld [vmem:[#allocation7 + $0x48] sm:$0xff]
    %v155 = vld [vmem:[#allocation7 + $0x50] sm:$0xff]
    %v156 = vld [vmem:[#allocation7 + $0x58] sm:$0xff]
    %v157 = vld [vmem:[#allocation7 + $0x60] sm:$0xff]
    %v158 = vld [vmem:[#allocation7 + $0x68] sm:$0xff]
    %v159 = vld [vmem:[#allocation7 + $0x70] sm:$0xff]
    %v160 = vld [vmem:[#allocation7 + $0x78] sm:$0xff]
    %v161 = vld [vmem:[%s4] sm:$0x1]
    %v163 = vlaneseq
    %v164 = vshrl.u32 %v163, 7
    %v165 = vsub.s32 0, %v164
    %v166 = vrot.slane %v161, %v165
    %168 = vmatprep.subr.mxu0 0.0
    %169 = vmatpush1.msra.mxu0 %v145
    %170 = vmatprep.subr.mxu0 0.0
    %171 = vmatpush1.msra.mxu0 %v146
    %172 = vmatprep.subr.mxu0 0.0
    %173 = vmatpush1.msra.mxu0 %v147
    %174 = vmatprep.subr.mxu0 0.0
    %175 = vmatpush1.msra.mxu0 %v148
    %176 = vmatprep.subr.mxu0 0.0
    %177 = vmatpush1.msra.mxu0 %v149
    %178 = vmatprep.subr.mxu0 0.0
    %179 = vmatpush1.msra.mxu0 %v150
    %180 = vmatprep.subr.mxu0 0.0
    %181 = vmatpush1.msra.mxu0 %v151
    %182 = vmatprep.subr.mxu0 0.0
    %183 = vmatpush1.msra.mxu0 %v152
    %184 = vmatprep.subr.mxu0 0.0
    %185 = vmatpush1.msra.mxu0 %v153
    %186 = vmatprep.subr.mxu0 0.0
    %187 = vmatpush1.msra.mxu0 %v154
    %188 = vmatprep.subr.mxu0 0.0
    %189 = vmatpush1.msra.mxu0 %v155
    %190 = vmatprep.subr.mxu0 0.0
    %191 = vmatpush1.msra.mxu0 %v156
    %192 = vmatprep.subr.mxu0 0.0
    %193 = vmatpush1.msra.mxu0 %v157
    %194 = vmatprep.subr.mxu0 0.0
    %195 = vmatpush1.msra.mxu0 %v158
    %196 = vmatprep.subr.mxu0 0.0
    %197 = vmatpush1.msra.mxu0 %v159
    %198 = vmatprep.subr.mxu0 0.0
    %199 = vmatpush1.msra.mxu0 %v160
    %200 = vmatprep.subr.mxu0 0.0
    %201 = vmatpush1.msra.mxu0 0.0
    %202 = vmatprep.subr.mxu0 0.0
    %203 = vmatpush1.msra.mxu0 0.0
    %204 = vmatprep.subr.mxu0 0.0
    %205 = vmatpush1.msra.mxu0 0.0
    %206 = vmatprep.subr.mxu0 0.0
    %207 = vmatpush1.msra.mxu0 0.0
    %208 = vmatprep.subr.mxu0 0.0
    %209 = vmatpush1.msra.mxu0 0.0
    %210 = vmatprep.subr.mxu0 0.0
    %211 = vmatpush1.msra.mxu0 0.0
    %212 = vmatprep.subr.mxu0 0.0
    %213 = vmatpush1.msra.mxu0 0.0
    %214 = vmatprep.subr.mxu0 0.0
    %215 = vmatpush1.msra.mxu0 0.0
    %216 = vmatprep.subr.mxu0 0.0
    %217 = vmatpush1.msra.mxu0 0.0
    %218 = vmatprep.subr.mxu0 0.0
    %219 = vmatpush1.msra.mxu0 0.0
    %220 = vmatprep.subr.mxu0 0.0
    %221 = vmatpush1.msra.mxu0 0.0
    %222 = vmatprep.subr.mxu0 0.0
    %223 = vmatpush1.msra.mxu0 0.0
    %224 = vmatprep.subr.mxu0 0.0
    %225 = vmatpush1.msra.mxu0 0.0
    %226 = vmatprep.subr.mxu0 0.0
    %227 = vmatpush1.msra.mxu0 0.0
    %228 = vmatprep.subr.mxu0 0.0
    %229 = vmatpush1.msra.mxu0 0.0
    %230 = vmatprep.subr.mxu0 0.0
    %231 = vmatpush1.msra.mxu0 0.0
    %232 = vmatprep.mubr.f32.mxu0 0.0
    %233 = vmatmul.mubr.f32.gmra.mrb[0].mxu0 %v144
    %v234 = vpop.f32.mrb[0].mxu0
    %v235 = vadd.f32 %v166, %v234
    %v236 = vpop.f32.mrb[0].mxu0
    %237 = vdwg.mxu0
    %238 = vst [vmem:[#allocation8] sm:$0xff] %v235
    // Predicated region
    $region34: #{tpu_custom_call.1} parent=1 // pred_check
      _
    $region35: #{tpu_custom_call.1} parent=1 // pred_check_branch
      %240 = sbr.rel (0) target = $region37
    $region36: #{tpu_custom_call.1} parent=1 // pred_region
      %s242 = ssub.s32 128, 128
      %243 = vsyncadd [#allocation4], %s242
      %s245 = sshll.u32 [#allocation8], 4
      %s246 = int_to_ptr.vmem [resolvable:$true] %s245
      %248 = dma.vmem_to_hbm [thread:$0]  %s246, 128, %s5, [#allocation4]
    $region37: #{tpu_custom_call.1} parent=1 // pred_fallthru
      _
    // Predicated region
    $region38: #{tpu_custom_call.1} parent=1 // pred_check
      _
    $region39: #{tpu_custom_call.1} parent=1 // pred_check_branch
      %250 = sbr.rel (0) target = $region41
    $region40: #{tpu_custom_call.1} parent=1 // pred_region
      %251 = dma.done [#allocation4], 128
    $region41: #{tpu_custom_call.1} parent=1 // pred_fallthru
      _
    %252 = vsyncpa [#allocation3], 1
    %253 = vsyncpa [#allocation6], 1
    %254 = vsyncpa [#allocation4], 1

</llo_original>
